<compile_context>
chip_gen: v7x
topology: tpu7x:2x2x1
jax: 0.10.0
libtpu: 0.0.40
codegen_flags: <defaults>
</compile_context>

<pallas_src>
import jax
import jax.numpy as jnp
from jax.experimental import pallas as pl
from jax.experimental.pallas import tpu as pltpu


def rgcn_kernel(lhat_ref, x_ref, w0_ref, w1_ref, b_ref, out_ref):
    lhat = lhat_ref[...]
    x = x_ref[...]

    # Chebyshev basis for K=2:  T0(L) X = X,  T1(L) X = L_hat @ X.
    lx = jnp.dot(lhat, x, preferred_element_type=jnp.float32).astype(x.dtype)

    # Fused ChebConv for the two live gates [z | h_tilde], each padded to 128 lanes.
    pre = (jnp.dot(x, w0_ref[...], preferred_element_type=jnp.float32)
           + jnp.dot(lx, w1_ref[...], preferred_element_type=jnp.float32)
           + b_ref[...])

    fp = w0_ref.shape[1] // 2          # padded per-gate lane width (static)
    z = jax.nn.sigmoid(pre[:, :fp])    # 128-lane aligned slice
    h_tilde = jnp.tanh(pre[:, fp:])
    h_new = (1.0 - z) * h_tilde        # z * H term vanishes because H == 0
    # Fused ReLU head (VPU, free).  Padded lanes: sigmoid(0)*tanh(0) -> exact 0.
    out_ref[...] = jnp.maximum(h_new, 0.0)


def build_scaled_laplacian(edge_index, edge_weight, num_nodes):
    """Dense scaled Laplacian as used by ChebConv (sym norm, lambda_max=2.0):
    L_hat = (2/lambda_max) * (I - D^{-1/2} A D^{-1/2}) - I = -D^{-1/2} A D^{-1/2}."""
    row = edge_index[0]
    col = edge_index[1]
    a = jnp.zeros((num_nodes, num_nodes), jnp.float32).at[row, col].add(edge_weight)
    deg = a.sum(axis=1)
    dinv = jnp.where(deg > 0, 1.0 / jnp.sqrt(deg), 0.0)
    a_norm = dinv[:, None] * a * dinv[None, :]
    l_sym = jnp.eye(num_nodes, dtype=jnp.float32) - a_norm
    l_hat = (2.0 / 2.0) * l_sym - jnp.eye(num_nodes, dtype=jnp.float32)
    return l_hat


@jax.jit
def recurrent_gcn_forward(x, edge_index, edge_weight, params):
    n, _ = x.shape
    filters = params["w_lin"].shape[0]
    fp = ((filters + 127) // 128) * 128          # pad each gate block to 128 lanes

    l_hat = build_scaled_laplacian(edge_index, edge_weight, n)

    def pad_lanes(a):                            # (r, filters) -> (r, fp)
        return jnp.pad(a, ((0, 0), (0, fp - filters)))

    # Pack the two live gates (z, h_tilde).  H-side ChebConvs reduce to their
    # biases (H == 0), so fold b_h* into the packed bias.  The r gate and all
    # h-side weight matrices are dead and never shipped to the kernel.
    w0 = jnp.concatenate([pad_lanes(params["w_xz0"]), pad_lanes(params["w_xh0"])], axis=1)
    w1 = jnp.concatenate([pad_lanes(params["w_xz1"]), pad_lanes(params["w_xh1"])], axis=1)
    b = jnp.concatenate([pad_lanes(params["b_xz"] + params["b_hz"]),
                         pad_lanes(params["b_xh"] + params["b_hh"])], axis=1)  # f32

    # bf16 operands for the MXU; f32 accumulation inside the kernel.
    l_bf = l_hat.astype(jnp.bfloat16)
    x_bf = x.astype(jnp.bfloat16)
    w0_bf = w0.astype(jnp.bfloat16)
    w1_bf = w1.astype(jnp.bfloat16)

    vmem = pl.BlockSpec(memory_space=pltpu.MemorySpace.VMEM)
    h_relu = pl.pallas_call(
        rgcn_kernel,
        out_shape=jax.ShapeDtypeStruct((n, 2 * fp // 2), jnp.float32),  # (n, fp), lane-dense
        in_specs=[vmem] * 5,
        out_specs=vmem,
    )(l_bf, x_bf, w0_bf, w1_bf, b)

    # Linear(filters -> 1) head in the XLA wrapper on the lane-dense kernel
    # output; padded lanes are exact zeros so a zero-padded w_lin is equivalent.
    w_lin_p = jnp.pad(params["w_lin"], ((0, fp - filters), (0, 0)))
    return h_relu @ w_lin_p + params["b_lin"]


def init_params(key, node_features, filters):
    """Deterministic synthetic parameters mirroring the full PyTorch module:
    ChebConv(K=2) has two [in, out] weights + bias per gate-conv (x- and h-side,
    for z/r/h), Linear(filters, 1) has [filters, 1] + bias.  (The r-gate and
    h-side weight matrices do not affect a single H=None step; see wrapper.)"""
    params = {}
    scale = 0.1
    names_shapes = []
    for gate in ("z", "r", "h"):
        names_shapes += [
            (f"w_x{gate}0", (node_features, filters)),
            (f"w_x{gate}1", (node_features, filters)),
            (f"b_x{gate}", (1, filters)),
            (f"w_h{gate}0", (filters, filters)),
            (f"w_h{gate}1", (filters, filters)),
            (f"b_h{gate}", (1, filters)),
        ]
    names_shapes += [("w_lin", (filters, 1)), ("b_lin", (1, 1))]
    keys = jax.random.split(key, len(names_shapes))
    for k, (name, shape) in zip(keys, names_shapes):
        params[name] = scale * jax.random.normal(k, shape, jnp.float32)
    return params


if __name__ == "__main__":
    num_nodes = 16
    node_features = 8
    filters = 32

    key = jax.random.PRNGKey(0)
    k_x, k_w, k_p = jax.random.split(key, 3)

    # Node features [N, F_in]
    x = jax.random.normal(k_x, (num_nodes, node_features), jnp.float32)

    # Ring graph, both directions: E = 2 * N edges
    src = jnp.arange(num_nodes, dtype=jnp.int32)
    dst = (src + 1) % num_nodes
    edge_index = jnp.stack([jnp.concatenate([src, dst]),
                            jnp.concatenate([dst, src])], axis=0)  # [2, 32]
    edge_weight = jax.random.uniform(k_w, (edge_index.shape[1],), jnp.float32,
                                     minval=0.5, maxval=1.5)

    params = init_params(k_p, node_features, filters)

    out = recurrent_gcn_forward(x, edge_index, edge_weight, params)
    out = jax.block_until_ready(out)
    assert out.shape == (num_nodes, 1)
    assert jnp.all(jnp.isfinite(out))
    print("KERNEL_OK")
</pallas_src>

<mosaic_0001>
module attributes {stable_mosaic.version = 11 : i64} {
  func.func private @main(%arg0: i32) attributes {dimension_semantics = [#tpu.dimension_semantics<core_parallel>], iteration_bounds = array<i64: 2>, tpu.core_type = #tpu.core_type<sc_scalar_subcore>, window_params = []} {
    return
  }
}

module attributes {stable_mosaic.version = 11 : i64} {
  func.func private @main(%arg0: i32) attributes {dimension_semantics = [#tpu.dimension_semantics<core_parallel>], iteration_bounds = array<i64: 2>, tpu.core_type = #tpu.core_type<sc_scalar_subcore>, window_params = []} {
    return
  }
}

module attributes {stable_mosaic.version = 11 : i64} {
  func.func @rgcn_kernel(%arg0: memref<16x16xbf16, #tpu.memory_space<vmem>>, %arg1: memref<16x8xbf16, #tpu.memory_space<vmem>>, %arg2: memref<8x256xbf16, #tpu.memory_space<vmem>>, %arg3: memref<8x256xbf16, #tpu.memory_space<vmem>>, %arg4: memref<1x256xf32, #tpu.memory_space<vmem>>, %arg5: memref<16x128xf32, #tpu.memory_space<vmem>>) attributes {dimension_semantics = [], scalar_prefetch = 0 : i64, scratch_operands = 0 : i64, tpu.core_type = #tpu.core_type<tc>} {
    %c0 = arith.constant 0 : index
    %c0_0 = arith.constant 0 : index
    %0 = vector.load %arg0[%c0, %c0_0] : memref<16x16xbf16, #tpu.memory_space<vmem>>, vector<16x16xbf16>
    %c0_1 = arith.constant 0 : index
    %c0_2 = arith.constant 0 : index
    %1 = vector.load %arg1[%c0_1, %c0_2] : memref<16x8xbf16, #tpu.memory_space<vmem>>, vector<16x8xbf16>
    %cst = arith.constant dense<0.000000e+00> : vector<16x8xf32>
    %2 = tpu.matmul %0, %1, %cst {dimension_numbers = #tpu.dot_dimension_numbers<[1], [0], [0], [1], [0, 0, 1, 1], [], []>} : vector<16x16xbf16>, vector<16x8xbf16>, vector<16x8xf32> -> vector<16x8xf32>
    %3 = arith.truncf %2 : vector<16x8xf32> to vector<16x8xbf16>
    %c0_3 = arith.constant 0 : index
    %c0_4 = arith.constant 0 : index
    %4 = vector.load %arg2[%c0_3, %c0_4] : memref<8x256xbf16, #tpu.memory_space<vmem>>, vector<8x256xbf16>
    %cst_5 = arith.constant dense<0.000000e+00> : vector<16x256xf32>
    %5 = tpu.matmul %1, %4, %cst_5 {dimension_numbers = #tpu.dot_dimension_numbers<[1], [0], [0], [1], [0, 0, 1, 1], [], []>} : vector<16x8xbf16>, vector<8x256xbf16>, vector<16x256xf32> -> vector<16x256xf32>
    %c0_6 = arith.constant 0 : index
    %c0_7 = arith.constant 0 : index
    %6 = vector.load %arg3[%c0_6, %c0_7] : memref<8x256xbf16, #tpu.memory_space<vmem>>, vector<8x256xbf16>
    %cst_8 = arith.constant dense<0.000000e+00> : vector<16x256xf32>
    %7 = tpu.matmul %3, %6, %cst_8 {dimension_numbers = #tpu.dot_dimension_numbers<[1], [0], [0], [1], [0, 0, 1, 1], [], []>} : vector<16x8xbf16>, vector<8x256xbf16>, vector<16x256xf32> -> vector<16x256xf32>
    %8 = arith.addf %5, %7 : vector<16x256xf32>
    %c0_9 = arith.constant 0 : index
    %c0_10 = arith.constant 0 : index
    %9 = vector.load %arg4[%c0_9, %c0_10] : memref<1x256xf32, #tpu.memory_space<vmem>>, vector<1x256xf32>
    %10 = vector.broadcast %9 : vector<1x256xf32> to vector<16x256xf32>
    %11 = arith.addf %8, %10 : vector<16x256xf32>
    %12 = vector.extract_strided_slice %11 {offsets = [0, 0], sizes = [16, 128], strides = [1, 1]} : vector<16x256xf32> to vector<16x128xf32>
    %13 = arith.negf %12 : vector<16x128xf32>
    %14 = math.exp %13 : vector<16x128xf32>
    %cst_11 = arith.constant 1.000000e+00 : f32
    %15 = vector.broadcast %cst_11 : f32 to vector<16x128xf32>
    %16 = arith.addf %15, %14 : vector<16x128xf32>
    %17 = arith.divf %15, %16 : vector<16x128xf32>
    %18 = vector.extract_strided_slice %11 {offsets = [0, 128], sizes = [16, 128], strides = [1, 1]} : vector<16x256xf32> to vector<16x128xf32>
    %19 = math.tanh %18 : vector<16x128xf32>
    %cst_12 = arith.constant 1.000000e+00 : f32
    %20 = vector.broadcast %cst_12 : f32 to vector<16x128xf32>
    %21 = arith.subf %20, %17 : vector<16x128xf32>
    %22 = arith.mulf %21, %19 : vector<16x128xf32>
    %cst_13 = arith.constant 0.000000e+00 : f32
    %23 = vector.broadcast %cst_13 : f32 to vector<16x128xf32>
    %24 = arith.maximumf %22, %23 : vector<16x128xf32>
    %c0_14 = arith.constant 0 : index
    %c0_15 = arith.constant 0 : index
    %25 = vector.load %arg5[%c0_14, %c0_15] : memref<16x128xf32, #tpu.memory_space<vmem>>, vector<16x128xf32>
    tpu.vector_store %arg5[%c0_14, %c0_15], %24 {strides = array<i32>} : memref<16x128xf32, #tpu.memory_space<vmem>>, vector<16x128xf32>,
    return
  }
}

</mosaic_0001>

<llo_original>
// kernel: recurrent_gcn_forward.1
$region0: #{recurrent_gcn_forward.1}
  #allocation0 [shape = 'u32[]', space=smem, size = 0x4, offset = 0x4, fixed_abs, tag = 'smem constant byte address 0x4 - core index']
  #allocation1 [shape = 'u32[144,128]{1,0:T(1,128)}', space=vmem, size = 0x12000, scoped, tag = 'internal scratch']
  %s0 = inlined_call_operand.vmem [shape: bf16[16,16], index: 0, kind: input, shape index: {}]
  %s1 = inlined_call_operand.vmem [shape: bf16[16,8], index: 1, kind: input, shape index: {}]
  %s2 = inlined_call_operand.vmem [shape: bf16[8,256], index: 2, kind: input, shape index: {}]
  %s3 = inlined_call_operand.vmem [shape: bf16[8,256], index: 3, kind: input, shape index: {}]
  %s4 = inlined_call_operand.vmem [shape: f32[1,256], index: 4, kind: input, shape index: {}]
  %s5 = inlined_call_operand.vmem [shape: f32[16,128], index: 5, kind: output, shape index: {}]
  %s6 = sld [smem:[#allocation0]]
  $region30: #{recurrent_gcn_forward.1} parent=0
    _
  %s8 = ssub.s32 1, %s6
  %s9 = scalar_select 0, %s8, %s6
  // Predicated region
  $region2: #{recurrent_gcn_forward.1} parent=0 // pred_check
    _
  $region3: #{recurrent_gcn_forward.1} parent=0 // pred_check_branch
    %11 = sbr.rel (0) target = $region5
  $region4: #{recurrent_gcn_forward.1} parent=0 // pred_region
    _
  $region5: #{recurrent_gcn_forward.1} parent=0 // pred_fallthru
    _
  // Predicated region
  $region6: #{recurrent_gcn_forward.1} parent=0 // pred_check
    _
  $region7: #{recurrent_gcn_forward.1} parent=0 // pred_check_branch
    %13 = sbr.rel (0) target = $region9
  $region8: #{recurrent_gcn_forward.1} parent=0 // pred_region
    _
  $region9: #{recurrent_gcn_forward.1} parent=0 // pred_fallthru
    _
  // Predicated region
  $region10: #{recurrent_gcn_forward.1} parent=0 // pred_check
    _
  $region11: #{recurrent_gcn_forward.1} parent=0 // pred_check_branch
    %15 = sbr.rel (0) target = $region13
  $region12: #{recurrent_gcn_forward.1} parent=0 // pred_region
    _
  $region13: #{recurrent_gcn_forward.1} parent=0 // pred_fallthru
    _
  // Predicated region
  $region14: #{recurrent_gcn_forward.1} parent=0 // pred_check
    _
  $region15: #{recurrent_gcn_forward.1} parent=0 // pred_check_branch
    %17 = sbr.rel (0) target = $region17
  $region16: #{recurrent_gcn_forward.1} parent=0 // pred_region
    _
  $region17: #{recurrent_gcn_forward.1} parent=0 // pred_fallthru
    _
  // Predicated region
  $region18: #{recurrent_gcn_forward.1} parent=0 // pred_check
    _
  $region19: #{recurrent_gcn_forward.1} parent=0 // pred_check_branch
    %19 = sbr.rel (0) target = $region21
  $region20: #{recurrent_gcn_forward.1} parent=0 // pred_region
    _
  $region21: #{recurrent_gcn_forward.1} parent=0 // pred_fallthru
    _
  %v21 = vld [vmem:[%s0] sm:$0xf]
  %v22 = vld [vmem:[%s0 + $0x4] sm:$0xf]
  %v23 = vld [vmem:[%s1] sm:$0xf]
  %v24 = vld [vmem:[%s1 + $0x4] sm:$0xf]
  %v27 = vunpack.c.l.b16 %v21
  %v28 = vunpack.c.l.b16 %v22
  %v29 = vpack.c.b16 %v28, %v27
  %v32 = vunpack.c.l.b16 %v23
  %v33 = vunpack.c.l.b16 %v24
  %v34 = vpack.c.b16 %v33, %v32
  %vm36 = vcmask 130048
  %v38 = vsel %vm36, %v29, 0
  %40 = vmatprep.subr.bf16.mxu0 0
  %41 = vmatpush1.bf16.msra.mxu0 %v34
  %42 = vmatprep.subr.bf16.mxu0 0
  %43 = vmatpush1.bf16.msra.mxu0 0
  %44 = vmatprep.subr.bf16.mxu0 0
  %45 = vmatpush1.bf16.msra.mxu0 0
  %46 = vmatprep.subr.bf16.mxu0 0
  %47 = vmatpush1.bf16.msra.mxu0 0
  %48 = vmatprep.subr.bf16.mxu0 0
  %49 = vmatpush1.bf16.msra.mxu0 0
  %50 = vmatprep.subr.bf16.mxu0 0
  %51 = vmatpush1.bf16.msra.mxu0 0
  %52 = vmatprep.subr.bf16.mxu0 0
  %53 = vmatpush1.bf16.msra.mxu0 0
  %54 = vmatprep.subr.bf16.mxu0 0
  %55 = vmatpush1.bf16.msra.mxu0 0
  %56 = vmatprep.subr.bf16.mxu0 0
  %57 = vmatpush1.bf16.msra.mxu0 0
  %58 = vmatprep.subr.bf16.mxu0 0
  %59 = vmatpush1.bf16.msra.mxu0 0
  %60 = vmatprep.subr.bf16.mxu0 0
  %61 = vmatpush1.bf16.msra.mxu0 0
  %62 = vmatprep.subr.bf16.mxu0 0
  %63 = vmatpush1.bf16.msra.mxu0 0
  %64 = vmatprep.subr.bf16.mxu0 0
  %65 = vmatpush1.bf16.msra.mxu0 0
  %66 = vmatprep.subr.bf16.mxu0 0
  %67 = vmatpush1.bf16.msra.mxu0 0
  %68 = vmatprep.subr.bf16.mxu0 0
  %69 = vmatpush1.bf16.msra.mxu0 0
  %70 = vmatprep.subr.bf16.mxu0 0
  %71 = vmatpush1.bf16.msra.mxu0 0
  %72 = vmatprep.mubr.bf16.mxu0 0
  %73 = vmatmul.mubr.bf16.gmra.mrb[0].mxu0 %v38
  %v74 = vpop.f32.mrb[0].mxu0
  %v75 = vadd.f32 0.0, %v74
  %v76 = vpop.f32.mrb[0].mxu0
  %v77 = vpop.f32.mrb[0].mxu0
  %v78 = vadd.f32 0.0, %v77
  %v79 = vpop.f32.mrb[0].mxu0
  %80 = vdwg.mxu0
  %v81 = vpack.c.bf16 %v78, %v75
  %v82 = vld [vmem:[%s2] sm:$0xff]
  %v83 = vld [vmem:[%s3] sm:$0xff]
  %v85 = vunpack.c.l.b16 %v83
  %v86 = vunpack.c.h.b16 %v83
  %v87 = vpack.c.b16 %v85, %v85
  %v88 = vpack.c.b16 %v86, %v86
  %vm89 = vcmask 64512
  %v91 = vsel %vm89, %v81, 0
  %vm93 = vcmask 1043456
  %v95 = vsel %vm93, %v87, 0
  %v98 = vsel %vm93, %v88, 0
  %100 = vmatprep.subr.bf16.mxu0 %v98
  %101 = vmatpush1.bf16.msra.mxu0 %v95
  %102 = vmatprep.subr.bf16.mxu0 0
  %103 = vmatpush1.bf16.msra.mxu0 0
  %104 = vmatprep.subr.bf16.mxu0 0
  %105 = vmatpush1.bf16.msra.mxu0 0
  %106 = vmatprep.subr.bf16.mxu0 0
  %107 = vmatpush1.bf16.msra.mxu0 0
  %108 = vmatprep.subr.bf16.mxu0 0
  %109 = vmatpush1.bf16.msra.mxu0 0
  %110 = vmatprep.subr.bf16.mxu0 0
  %111 = vmatpush1.bf16.msra.mxu0 0
  %112 = vmatprep.subr.bf16.mxu0 0
  %113 = vmatpush1.bf16.msra.mxu0 0
  %114 = vmatprep.subr.bf16.mxu0 0
  %115 = vmatpush1.bf16.msra.mxu0 0
  %116 = vmatprep.subr.bf16.mxu0 0
  %117 = vmatpush1.bf16.msra.mxu0 0
  %118 = vmatprep.subr.bf16.mxu0 0
  %119 = vmatpush1.bf16.msra.mxu0 0
  %120 = vmatprep.subr.bf16.mxu0 0
  %121 = vmatpush1.bf16.msra.mxu0 0
  %122 = vmatprep.subr.bf16.mxu0 0
  %123 = vmatpush1.bf16.msra.mxu0 0
  %124 = vmatprep.subr.bf16.mxu0 0
  %125 = vmatpush1.bf16.msra.mxu0 0
  %126 = vmatprep.subr.bf16.mxu0 0
  %127 = vmatpush1.bf16.msra.mxu0 0
  %128 = vmatprep.subr.bf16.mxu0 0
  %129 = vmatpush1.bf16.msra.mxu0 0
  %130 = vmatprep.subr.bf16.mxu0 0
  %131 = vmatpush1.bf16.msra.mxu0 0
  %132 = vmatprep.mubr.bf16.mxu0 0
  %133 = vmatmul.mubr.bf16.gmra.mrb[0].mxu0 %v91
  %v134 = vpop.f32.mrb[0].mxu0
  %v135 = vadd.f32 0.0, %v134
  %v136 = vpop.f32.mrb[0].mxu0
  %v137 = vadd.f32 0.0, %v136
  %v138 = vpop.f32.mrb[0].mxu0
  %v139 = vadd.f32 0.0, %v138
  %v140 = vpop.f32.mrb[0].mxu0
  %v141 = vadd.f32 0.0, %v140
  %142 = vdwg.mxu0
  %v144 = vunpack.c.l.b16 %v82
  %v145 = vunpack.c.h.b16 %v82
  %v146 = vpack.c.b16 %v144, %v144
  %v147 = vpack.c.b16 %v145, %v145
  %v149 = vsel %vm89, %v34, 0
  %v152 = vsel %vm93, %v146, 0
  %v155 = vsel %vm93, %v147, 0
  %157 = vmatprep.subr.bf16.mxu0 %v155
  %158 = vmatpush1.bf16.msra.mxu0 %v152
  %159 = vmatprep.subr.bf16.mxu0 0
  %160 = vmatpush1.bf16.msra.mxu0 0
  %161 = vmatprep.subr.bf16.mxu0 0
  %162 = vmatpush1.bf16.msra.mxu0 0
  %163 = vmatprep.subr.bf16.mxu0 0
  %164 = vmatpush1.bf16.msra.mxu0 0
  %165 = vmatprep.subr.bf16.mxu0 0
  %166 = vmatpush1.bf16.msra.mxu0 0
  %167 = vmatprep.subr.bf16.mxu0 0
  %168 = vmatpush1.bf16.msra.mxu0 0
  %169 = vmatprep.subr.bf16.mxu0 0
  %170 = vmatpush1.bf16.msra.mxu0 0
  %171 = vmatprep.subr.bf16.mxu0 0
  %172 = vmatpush1.bf16.msra.mxu0 0
  %173 = vmatprep.subr.bf16.mxu0 0
  %174 = vmatpush1.bf16.msra.mxu0 0
  %175 = vmatprep.subr.bf16.mxu0 0
  %176 = vmatpush1.bf16.msra.mxu0 0
  %177 = vmatprep.subr.bf16.mxu0 0
  %178 = vmatpush1.bf16.msra.mxu0 0
  %179 = vmatprep.subr.bf16.mxu0 0
  %180 = vmatpush1.bf16.msra.mxu0 0
  %181 = vmatprep.subr.bf16.mxu0 0
  %182 = vmatpush1.bf16.msra.mxu0 0
  %183 = vmatprep.subr.bf16.mxu0 0
  %184 = vmatpush1.bf16.msra.mxu0 0
  %185 = vmatprep.subr.bf16.mxu0 0
  %186 = vmatpush1.bf16.msra.mxu0 0
  %187 = vmatprep.subr.bf16.mxu0 0
  %188 = vmatpush1.bf16.msra.mxu0 0
  %189 = vmatprep.mubr.bf16.mxu0 0
  %190 = vmatmul.mubr.bf16.gmra.mrb[0].mxu0 %v149
  %v191 = vpop.f32.mrb[0].mxu0
  %v192 = vadd.f32 %v135, %v191
  %v193 = vpop.f32.mrb[0].mxu0
  %v194 = vadd.f32 %v137, %v193
  %v195 = vpop.f32.mrb[0].mxu0
  %v196 = vadd.f32 %v139, %v195
  %v197 = vpop.f32.mrb[0].mxu0
  %v198 = vadd.f32 %v141, %v197
  %199 = vdwg.mxu0
  %v200 = vld [vmem:[%s4] sm:$0x3]
  %v202 = vlaneseq
  %v203 = vshrl.u32 %v202, 7
  %v204 = vsub.s32 0, %v203
  %v205 = vrot.slane %v200, %v204
  %v206 = vlaneseq
  %v207 = vshrl.u32 %v206, 7
  %v208 = vsub.s32 1, %v207
  %v209 = vrot.slane %v200, %v208
  %v212 = vadd.f32 %v192, %v205
  %v213 = vadd.f32 %v194, %v209
  %v214 = vadd.f32 %v196, %v205
  %v215 = vadd.f32 %v198, %v209
  %v216 = vxor.u32 %v212, 2147483648
  %v217 = vxor.u32 %v214, 2147483648
  %v218 = vmul.f32 %v216, 1.442695
  %v219 = vpow.pop %v218
  %v220 = vmul.f32 %v217, 1.442695
  %v221 = vpow.pop %v220
  %v222 = vadd.f32 %v219, 1.0
  %v223 = vadd.f32 %v221, 1.0
  %v224 = vrcp.pop %v222
  %v225 = vmul.f32 1.0, %v224
  %v226 = vrcp.pop %v223
  %v227 = vmul.f32 1.0, %v226
  %v228 = vtanh.pop %v213
  %v229 = vtanh.pop %v215
  %v230 = vsub.f32 1.0, %v225
  %v231 = vsub.f32 1.0, %v227
  %v232 = vmul.f32 %v230, %v228
  %v233 = vmul.f32 %v231, %v229
  %v234 = vmax.f32 %v232, 0.0
  %v235 = vmax.f32 %v233, 0.0
  %236 = vst [vmem:[%s5] sm:$0xff] %v234
  %237 = vst [vmem:[%s5 + $0x8] sm:$0xff] %v235
  // Predicated region
  $region22: #{recurrent_gcn_forward.1} parent=0 // pred_check
    _
  $region23: #{recurrent_gcn_forward.1} parent=0 // pred_check_branch
    %239 = sbr.rel (0) target = $region25
  $region24: #{recurrent_gcn_forward.1} parent=0 // pred_region
    _
  $region25: #{recurrent_gcn_forward.1} parent=0 // pred_fallthru
    _
  // Predicated region
  $region26: #{recurrent_gcn_forward.1} parent=0 // pred_check
    _
  $region27: #{recurrent_gcn_forward.1} parent=0 // pred_check_branch
    %241 = sbr.rel (0) target = $region29
  $region28: #{recurrent_gcn_forward.1} parent=0 // pred_region
    _
  $region29: #{recurrent_gcn_forward.1} parent=0 // pred_fallthru
    _

</llo_original>
